<compile_context>
chip_gen: v7x
topology: tpu7x:2x2x1
jax: 0.10.0
libtpu: 0.0.40
codegen_flags: <defaults>
</compile_context>

<pallas_src>
import functools

import jax
import jax.numpy as jnp
from jax.experimental import pallas as pl
from jax.experimental.pallas import tpu as pltpu

EPS = 1e-5           # nn.BatchNorm2d default eps
TOTAL_BITS = 8       # fixed-point word length (sign + intlen + frac)


def _bn_quant_kernel(x_ref, scale_ref, bias_ref, o_ref, *, inv_step, qlo, qhi):
    # Elementwise: quantize to the 8-bit fixed-point grid, then per-row BN affine.
    x = x_ref[...].astype(jnp.float32)                    # (row_tile, col_tile)
    q = jnp.clip(jnp.round(x * inv_step), qlo, qhi)       # integer grid in f32
    # fused_scale already contains the dequant step, so no extra multiply here.
    o_ref[...] = (q * scale_ref[...] + bias_ref[...]).astype(o_ref.dtype)


def _vmem_capacity_bytes():
    try:
        info = pltpu.get_tpu_info()
        return int(getattr(info, "vmem_capacity_bytes", 64 << 20))
    except Exception:
        return 64 << 20   # conservative (v7x) fallback


def _sublane_mult(dtype):
    # min legal sublane tile: 8 for 4-byte, 16 for 2-byte, 32 for 1-byte dtypes
    return max(8, 32 // jnp.dtype(dtype).itemsize)


def bn_quant_forward(x_nchw, gamma, beta, running_mean, running_var, *,
                     intlen=3, out_dtype=None, in_place=True):
    """x_nchw: (N, C, H, W). Returns (N, C, H, W) in `out_dtype` (default: input dtype)."""
    N, C, H, W = x_nchw.shape
    rows, cols = N * C, H * W
    in_dtype = jnp.dtype(x_nchw.dtype)
    out_dtype = in_dtype if out_dtype is None else jnp.dtype(out_dtype)

    # ---- fixed-point parameters (static Python constants) ----
    frac_bits = (TOTAL_BITS - 1) - intlen
    step = 2.0 ** (-frac_bits)
    inv_step = 2.0 ** frac_bits
    qhi = float(2 ** (TOTAL_BITS - 1) - 1)     # +127
    qlo = float(-(2 ** (TOTAL_BITS - 1)))      # -128

    # ---- per-channel BN affine, dequant step folded in, expanded to per-row ----
    inv_std = jax.lax.rsqrt(running_var.astype(jnp.float32) + EPS)
    scale_c = gamma.astype(jnp.float32) * inv_std                       # (C,)
    bias_c = beta.astype(jnp.float32) - running_mean.astype(jnp.float32) * scale_c
    fused_scale_rows = jnp.tile(step * scale_c, N).reshape(rows, 1)     # (N*C, 1)
    bias_rows = jnp.tile(bias_c, N).reshape(rows, 1)                    # (N*C, 1)

    # Native-layout, native-dtype view: (N,C,H,W) -> (N*C, H*W). Free under jit.
    x2d = x_nchw.reshape(rows, cols)

    # ---- generation-aware tile selection ----
    in_item = in_dtype.itemsize
    out_item = out_dtype.itemsize
    row_mult = max(_sublane_mult(in_dtype), _sublane_mult(out_dtype))

    vmem_cap = _vmem_capacity_bytes()
    big_vmem = vmem_cap >= (100 << 20)          # v5e / v6e: 128 MiB; v7x: 64 MiB
    block_budget = (16 << 20) if big_vmem else (8 << 20)
    vmem_cap_gen = (96 << 20) if big_vmem else (48 << 20)

    # Lane axis: always a multiple of 128 (cap 2048); ragged edge -> masked edge block.
    if cols < 128:
        col_tile = cols                          # full lane axis (always legal)
    else:
        col_tile = min(2048, (cols // 128) * 128)

    max_rows = max(1, block_budget // (col_tile * in_item))
    if rows <= max_rows:
        row_tile = rows                          # full row axis (always legal)
    else:
        row_tile = max(row_mult, (max_rows // row_mult) * row_mult)

    # Ensure >=2 blocks so both v7x TensorCores get work (negligible cost on v5e/v6e).
    if pl.cdiv(rows, row_tile) * pl.cdiv(cols, col_tile) < 2:
        if rows >= 2 * row_mult:
            row_tile = max(row_mult, (pl.cdiv(rows, 2) // row_mult) * row_mult)
        elif col_tile >= 256:
            col_tile //= 2                       # still a multiple of 128

    grid = (pl.cdiv(rows, row_tile), pl.cdiv(cols, col_tile))

    in_block = row_tile * col_tile * in_item
    out_block = row_tile * col_tile * out_item
    vmem_limit = int(min(vmem_cap_gen,
                         max(16 << 20, 2 * (in_block + out_block) + (4 << 20))))

    data_spec = pl.BlockSpec((row_tile, col_tile), lambda i, j: (i, j))
    param_spec = pl.BlockSpec((row_tile, 1), lambda i, j: (i, 0))

    # In-place over the input slab when dtypes match (pair with donated input).
    aliases = {0: 0} if (in_place and out_dtype == in_dtype) else {}

    out2d = pl.pallas_call(
        functools.partial(_bn_quant_kernel, inv_step=inv_step, qlo=qlo, qhi=qhi),
        out_shape=jax.ShapeDtypeStruct((rows, cols), out_dtype),
        grid_spec=pltpu.PrefetchScalarGridSpec(
            num_scalar_prefetch=0,
            grid=grid,                            # rows outer, cols inner (keep!)
            in_specs=[data_spec, param_spec, param_spec],
            out_specs=data_spec,
        ),
        input_output_aliases=aliases,
        compiler_params=pltpu.CompilerParams(
            dimension_semantics=("parallel", "parallel"),
            vmem_limit_bytes=vmem_limit),
    )(x2d, fused_scale_rows, bias_rows)

    return out2d.reshape(N, C, H, W)


def _reference(x_nchw, gamma, beta, mean, var, intlen=3):
    frac_bits = (TOTAL_BITS - 1) - intlen
    step = 2.0 ** (-frac_bits)
    qmax = 2.0 ** intlen - step
    qmin = -(2.0 ** intlen)
    xq = jnp.clip(jnp.round(x_nchw / step) * step, qmin, qmax)
    g = gamma[None, :, None, None]
    b = beta[None, :, None, None]
    m = mean[None, :, None, None]
    v = var[None, :, None, None]
    return (xq - m) * g / jnp.sqrt(v + EPS) + b


if __name__ == "__main__":
    key = jax.random.PRNGKey(0)
    kx, kg, kb, km, kv, kx2 = jax.random.split(key, 6)

    # ---- f32 path (matches the torch module's default dtype) ----
    N, C, H, W = 2, 4, 16, 16
    x = jax.random.normal(kx, (N, C, H, W), dtype=jnp.float32) * 2.0
    gamma = 1.0 + 0.1 * jax.random.normal(kg, (C,), dtype=jnp.float32)
    beta = 0.1 * jax.random.normal(kb, (C,), dtype=jnp.float32)
    running_mean = 0.2 * jax.random.normal(km, (C,), dtype=jnp.float32)
    running_var = 1.0 + 0.1 * jax.random.uniform(kv, (C,), dtype=jnp.float32)

    ref = _reference(x, gamma, beta, running_mean, running_var, intlen=3)

    fwd = jax.jit(functools.partial(bn_quant_forward, intlen=3),
                  donate_argnums=(0,))
    out = jax.block_until_ready(fwd(x, gamma, beta, running_mean, running_var))
    assert out.shape == (N, C, H, W) and out.dtype == jnp.float32
    assert jnp.max(jnp.abs(out - ref)) < 1e-4

    # ---- bf16 activation path (narrow dtype in + out: ~half the HBM traffic) ----
    N2, C2 = 2, 8
    x_bf = (jax.random.normal(kx2, (N2, C2, H, W), dtype=jnp.float32) * 2.0
            ).astype(jnp.bfloat16)
    gamma2 = jnp.concatenate([gamma, gamma])
    beta2 = jnp.concatenate([beta, beta])
    mean2 = jnp.concatenate([running_mean, running_mean])
    var2 = jnp.concatenate([running_var, running_var])

    ref_bf = _reference(x_bf.astype(jnp.float32), gamma2, beta2, mean2, var2, intlen=3)

    fwd_bf = jax.jit(functools.partial(bn_quant_forward, intlen=3),
                     donate_argnums=(0,))
    out_bf = jax.block_until_ready(fwd_bf(x_bf, gamma2, beta2, mean2, var2))
    assert out_bf.shape == (N2, C2, H, W) and out_bf.dtype == jnp.bfloat16
    assert jnp.max(jnp.abs(out_bf.astype(jnp.float32) - ref_bf)) < 6e-2

    print("KERNEL_OK")
</pallas_src>

<mosaic_0001>
module attributes {stable_mosaic.version = 11 : i64} {
  func.func @_bn_quant_kernel(%arg0: i32, %arg1: i32, %arg2: memref<8x128xf32, #tpu.memory_space<vmem>>, %arg3: memref<8x1xf32, #tpu.memory_space<vmem>>, %arg4: memref<8x1xf32, #tpu.memory_space<vmem>>, %arg5: memref<8x128xf32, #tpu.memory_space<vmem>>) attributes {dimension_semantics = [#tpu.dimension_semantics<parallel>, #tpu.dimension_semantics<parallel>], iteration_bounds = array<i64: 1, 2>, scalar_prefetch = 0 : i64, scratch_operands = 0 : i64, tpu.core_type = #tpu.core_type<tc>, window_params = [{transform_indices = @transform_0, window_bounds = array<i64: 8, 128>}, {transform_indices = @transform_1, window_bounds = array<i64: 8, 1>}, {transform_indices = @transform_2, window_bounds = array<i64: 8, 1>}, {transform_indices = @transform_3, window_bounds = array<i64: 8, 128>}]} {
    %c0 = arith.constant 0 : index
    %c0_0 = arith.constant 0 : index
    %0 = vector.load %arg2[%c0, %c0_0] : memref<8x128xf32, #tpu.memory_space<vmem>>, vector<8x128xf32>
    %cst = arith.constant 1.600000e+01 : f32
    %1 = vector.broadcast %cst : f32 to vector<8x128xf32>
    %2 = arith.mulf %0, %1 : vector<8x128xf32>
    %3 = math.roundeven %2 : vector<8x128xf32>
    %cst_1 = arith.constant -1.280000e+02 : f32
    %cst_2 = arith.constant 1.270000e+02 : f32
    %4 = vector.broadcast %cst_1 : f32 to vector<8x128xf32>
    %5 = arith.maximumf %4, %3 : vector<8x128xf32>
    %6 = vector.broadcast %cst_2 : f32 to vector<8x128xf32>
    %7 = arith.minimumf %6, %5 : vector<8x128xf32>
    %c0_3 = arith.constant 0 : index
    %c0_4 = arith.constant 0 : index
    %8 = vector.load %arg3[%c0_3, %c0_4] : memref<8x1xf32, #tpu.memory_space<vmem>>, vector<8x1xf32>
    %9 = vector.broadcast %8 : vector<8x1xf32> to vector<8x128xf32>
    %10 = arith.mulf %7, %9 : vector<8x128xf32>
    %c0_5 = arith.constant 0 : index
    %c0_6 = arith.constant 0 : index
    %11 = vector.load %arg4[%c0_5, %c0_6] : memref<8x1xf32, #tpu.memory_space<vmem>>, vector<8x1xf32>
    %12 = vector.broadcast %11 : vector<8x1xf32> to vector<8x128xf32>
    %13 = arith.addf %10, %12 : vector<8x128xf32>
    %c0_7 = arith.constant 0 : index
    %c0_8 = arith.constant 0 : index
    %14 = vector.load %arg5[%c0_7, %c0_8] : memref<8x128xf32, #tpu.memory_space<vmem>>, vector<8x128xf32>
    tpu.vector_store %arg5[%c0_7, %c0_8], %13 {strides = array<i32>} : memref<8x128xf32, #tpu.memory_space<vmem>>, vector<8x128xf32>,
    return
  }
  func.func @transform_0(%arg0: i32, %arg1: i32) -> (i32, i32) {
    %c0_i32 = arith.constant 0 : i32
    return %arg0, %arg1 : i32, i32
  }
  func.func @transform_1(%arg0: i32, %arg1: i32) -> (i32, i32) {
    %c0_i32 = arith.constant 0 : i32
    %c0_i32_0 = arith.constant 0 : i32
    return %arg0, %c0_i32 : i32, i32
  }
  func.func @transform_2(%arg0: i32, %arg1: i32) -> (i32, i32) {
    %c0_i32 = arith.constant 0 : i32
    %c0_i32_0 = arith.constant 0 : i32
    return %arg0, %c0_i32 : i32, i32
  }
  func.func @transform_3(%arg0: i32, %arg1: i32) -> (i32, i32) {
    %c0_i32 = arith.constant 0 : i32
    return %arg0, %arg1 : i32, i32
  }
}

</mosaic_0001>

<llo_original>
// kernel: tile.0
$region0: #{tile.0}
  %s0 = inlined_call_operand.vmem [shape: f32[2,4], index: 0, kind: input, shape index: {}]
  %s1 = inlined_call_operand.vmem [shape: f32[8,1], index: 1, kind: output, shape index: {}]
  $region1: #{tile.0} parent=0
    #allocation0 [shape = 'u8[4096]{0}', space=vmem, size = 0x1000, scoped, tag = 'scoped mem for input reshape']
    %s3 = sshllo.u32 0, 2
    %v4 = vld [vmem:[%s0] sm:%s3]
    %5 = vst [vmem:[#allocation0] sm:%s3] %v4
    %v6 = vld [vmem:[#allocation0] sm:$0x3]
    %vm7 = vcmask 7168
    %8 = vst.msk [vmem:[%s1] ss:$4 sm:$0x3] %vm7, %v6
    %v9 = vld [vmem:[#allocation0] sm:$0x3]
    %10 = vrot.lane.b32.xlu0 %v9, 127
    %v11 = vpop.permute.xlu0 %10
    %vm12 = vcmask 7168
    %s13 = scalar_lea.vmem %s1, 1
    %14 = vst.msk [vmem:[%s13] ss:$4 sm:$0x3] %vm12, %v11
    %v15 = vld [vmem:[#allocation0] sm:$0x3]
    %16 = vrot.lane.b32.xlu0 %v15, 126
    %v17 = vpop.permute.xlu0 %16
    %vm18 = vcmask 7168
    %s19 = scalar_lea.vmem %s1, 2
    %20 = vst.msk [vmem:[%s19] ss:$4 sm:$0x3] %vm18, %v17
    %v21 = vld [vmem:[#allocation0] sm:$0x3]
    %22 = vrot.lane.b32.xlu0 %v21, 125
    %v23 = vpop.permute.xlu0 %22
    %vm24 = vcmask 7168
    %s25 = scalar_lea.vmem %s1, 3
    %26 = vst.msk [vmem:[%s25] ss:$4 sm:$0x3] %vm24, %v23

// kernel: tile.13
$region0: #{tile.13}
  #allocation0 [shape = 's32[1]{0}', space=sflag, size = 0x4, scoped, tag = 'scoped memory for tile.13']
  %s0 = inlined_call_operand.vmem [shape: f32[4], index: 0, kind: input, shape index: {}]
  %s1 = inlined_call_operand.vmem [shape: f32[2,4], index: 1, kind: output, shape index: {}]
  // Predicated region
  $region2: #{tile.13} parent=0 // pred_check
    _
  $region3: #{tile.13} parent=0 // pred_check_branch
    %3 = sbr.rel (0) target = $region5
  $region4: #{tile.13} parent=0 // pred_region
    _
  $region5: #{tile.13} parent=0 // pred_fallthru
    _
  %v4 = vld [vmem:[%s0] ss:$0 sm:$0xff]
  %5 = vst [vmem:[%s1] sm:$0x3] %v4

// kernel: bn_quant_forward.1
$region0: #{bn_quant_forward.1}
  #allocation0 [shape = 'u32[]', space=smem, size = 0x4, offset = 0x4, fixed_abs, tag = 'smem constant byte address 0x4 - core index']
  #allocation1 [shape = 'u32[144,128]{1,0:T(1,128)}', space=vmem, size = 0x12000, scoped, tag = 'internal scratch']
  %s0 = inlined_call_operand.vmem [shape: f32[8,256], index: 0, kind: input, shape index: {}, may-alias: {0,3}]
  %s1 = inlined_call_operand.vmem [shape: f32[8,1], index: 1, kind: input, shape index: {}]
  %s2 = inlined_call_operand.vmem [shape: f32[8,1], index: 2, kind: input, shape index: {}]
  %s3 = inlined_call_operand.vmem [shape: f32[8,256], index: 3, kind: output, shape index: {}, may-alias: {0,3}]
  %s4 = sld [smem:[#allocation0]]
  $region45: #{bn_quant_forward.1} parent=0
    _
  %s6 = ssub.s32 1, %s4
  %s7 = scalar_select 0, %s6, %s4
  loop: start=0, step=1, limit=4
  $region2: #{bn_quant_forward.1} parent=0 // loop_pre_header
    _
  $region3: #{bn_quant_forward.1} parent=0 // loop_header
    %s9 = sphi 0, %s13
    %p10 = scmp.ge.s32.totalorder %s9, 4
    %s16 = sphi 0, %s28
    %s17 = sphi 0, %s24
    %s18 = sphi 0, %s16
    %s19 = sphi 0, %s17
    %s20 = sphi 0, %s18
    %s21 = sphi 0, %s19
    %s33 = sphi 0, %s35
    %s36 = sphi 0, %s33
    %s37 = sphi 0, %s36
    %s53 = sphi 0, %s37
    %s59 = sphi 0, %s61
    %s62 = sphi 0, %s59
    %s63 = sphi 0, %s62
    %s79 = sphi 0, %s63
    %s85 = sphi 0, %s87
    %s88 = sphi 0, %s85
    %s89 = sphi 0, %s88
    %s105 = sphi 0, %s89
    %s113 = sphi 0, %s115
    %s116 = sphi 0, %s113
    %s117 = sphi 0, %s116
    %s133 = sphi 0, %s117
  $region4: #{bn_quant_forward.1} parent=0 // loop_header_branch
    %12 = sbr.rel (%p10) target = $region8
  $region5: #{bn_quant_forward.1} parent=0 // loop_body
    %s14 = ssub.s32 %s9, 1
    %s15 = ssub.s32 %s9, 2
    %s22 = sadd.s32 1, %s17
    %p23 = scmp.ge.s32.totalorder %s22, 2
    %s24 = scalar_select %p23, 0, %s22
    %s25 = sadd.s32 1, %s16
    %s26 = scalar_select %p23, %s25, %s16
    %p27 = scmp.ge.s32.totalorder %s26, 1
    %s28 = scalar_select %p27, 0, %s26
    %s29 = ssub.s32 %s16, %s28
    %s30 = ssub.s32 %s17, %s24
    %s31 = sor.u32 %s29, %s30
    %p32 = scmp.eq.s32.totalorder %s31, 0
    %s34 = sadd.s32 %s33, 1
    %s35 = scalar_select %p32, %s33, %s34
    %p38 = pneg %p32
    %p39 = scmp.eq.s32.totalorder %s9, 1
    %p40 = por %p38, %p39
    %p41 = scmp.ne.s32.totalorder %s33, %s36
    %p42 = scmp.eq.s32.totalorder %s9, 0
    %p43 = por %p41, %p42
    %p44 = scmp.ne.s32.totalorder %s33, %s36
    %p45 = scmp.eq.s32.totalorder %s14, 1
    %p46 = por %p44, %p45
    %p47 = scmp.ne.s32.totalorder %s36, %s37
    %p48 = scmp.eq.s32.totalorder %s14, 0
    %p49 = por %p47, %p48
    %p50 = scmp.ne.s32.totalorder %s36, %s37
    %p51 = scmp.eq.s32.totalorder %s15, 1
    %p52 = por %p50, %p51
    %p54 = scmp.ne.s32.totalorder %s37, %s53
    %p55 = scmp.eq.s32.totalorder %s15, 0
    %p56 = por %p54, %p55
    %s57 = ssub.s32 %s16, %s28
    %p58 = scmp.eq.s32.totalorder %s57, 0
    %s60 = sadd.s32 %s59, 1
    %s61 = scalar_select %p58, %s59, %s60
    %p64 = pneg %p58
    %p65 = scmp.eq.s32.totalorder %s9, 1
    %p66 = por %p64, %p65
    %p67 = scmp.ne.s32.totalorder %s59, %s62
    %p68 = scmp.eq.s32.totalorder %s9, 0
    %p69 = por %p67, %p68
    %p70 = scmp.ne.s32.totalorder %s59, %s62
    %p71 = scmp.eq.s32.totalorder %s14, 1
    %p72 = por %p70, %p71
    %p73 = scmp.ne.s32.totalorder %s62, %s63
    %p74 = scmp.eq.s32.totalorder %s14, 0
    %p75 = por %p73, %p74
    %p76 = scmp.ne.s32.totalorder %s62, %s63
    %p77 = scmp.eq.s32.totalorder %s15, 1
    %p78 = por %p76, %p77
    %p80 = scmp.ne.s32.totalorder %s63, %s79
    %p81 = scmp.eq.s32.totalorder %s15, 0
    %p82 = por %p80, %p81
    %s83 = ssub.s32 %s16, %s28
    %p84 = scmp.eq.s32.totalorder %s83, 0
    %s86 = sadd.s32 %s85, 1
    %s87 = scalar_select %p84, %s85, %s86
    %p90 = pneg %p84
    %p91 = scmp.eq.s32.totalorder %s9, 1
    %p92 = por %p90, %p91
    %p93 = scmp.ne.s32.totalorder %s85, %s88
    %p94 = scmp.eq.s32.totalorder %s9, 0
    %p95 = por %p93, %p94
    %p96 = scmp.ne.s32.totalorder %s85, %s88
    %p97 = scmp.eq.s32.totalorder %s14, 1
    %p98 = por %p96, %p97
    %p99 = scmp.ne.s32.totalorder %s88, %s89
    %p100 = scmp.eq.s32.totalorder %s14, 0
    %p101 = por %p99, %p100
    %p102 = scmp.ne.s32.totalorder %s88, %s89
    %p103 = scmp.eq.s32.totalorder %s15, 1
    %p104 = por %p102, %p103
    %p106 = scmp.ne.s32.totalorder %s89, %s105
    %p107 = scmp.eq.s32.totalorder %s15, 0
    %p108 = por %p106, %p107
    %s109 = ssub.s32 %s16, %s28
    %s110 = ssub.s32 %s17, %s24
    %s111 = sor.u32 %s109, %s110
    %p112 = scmp.eq.s32.totalorder %s111, 0
    %s114 = sadd.s32 %s113, 1
    %s115 = scalar_select %p112, %s113, %s114
    %p118 = pneg %p112
    %p119 = scmp.eq.s32.totalorder %s9, 1
    %p120 = por %p118, %p119
    %p121 = scmp.ne.s32.totalorder %s113, %s116
    %p122 = scmp.eq.s32.totalorder %s9, 0
    %p123 = por %p121, %p122
    %p124 = scmp.ne.s32.totalorder %s113, %s116
    %p125 = scmp.eq.s32.totalorder %s14, 1
    %p126 = por %p124, %p125
    %p127 = scmp.ne.s32.totalorder %s116, %s117
    %p128 = scmp.eq.s32.totalorder %s14, 0
    %p129 = por %p127, %p128
    %p130 = scmp.ne.s32.totalorder %s116, %s117
    %p131 = scmp.eq.s32.totalorder %s15, 1
    %p132 = por %p130, %p131
    %p134 = scmp.ne.s32.totalorder %s117, %s133
    %p135 = scmp.eq.s32.totalorder %s15, 0
    %p136 = por %p134, %p135
    %p137 = scmp.le.s32.totalorder 1, %s9
    %p138 = scmp.lt.s32.totalorder %s9, 3
    %p139 = pnand %p137, %p138
    %p140 = pneg %p139
    // Predicated region
    $region9: #{bn_quant_forward.1} parent=5 // pred_check
      _
    $region10: #{bn_quant_forward.1} parent=5 // pred_check_branch
      %142 = sbr.rel (%p139) target = $region12
    $region11: #{bn_quant_forward.1} parent=5 // pred_region
      %s143 = ssub.s32 %s9, 1
      // Predicated region
      $region13: #{bn_quant_forward.1} parent=11 // pred_check
        %p144 = pneg %p75
      $region14: #{bn_quant_forward.1} parent=11 // pred_check_branch
        %146 = sbr.rel (%p144) target = $region16
      $region15: #{bn_quant_forward.1} parent=11 // pred_region
        %p147 = scmp.lt.s32.totalorder %s18, 0
        %s148 = scalar_select %p147, %s18, 0
        %s149 = smul.addr %s148, 8
        %s150 = scalar_lea.vmem %s1, %s149
      $region16: #{bn_quant_forward.1} parent=11 // pred_fallthru
        _
      // Predicated region
      $region17: #{bn_quant_forward.1} parent=11 // pred_check
        %p151 = pneg %p101
      $region18: #{bn_quant_forward.1} parent=11 // pred_check_branch
        %153 = sbr.rel (%p151) target = $region20
      $region19: #{bn_quant_forward.1} parent=11 // pred_region
        %p154 = scmp.lt.s32.totalorder %s18, 0
        %s155 = scalar_select %p154, %s18, 0
        %s156 = smul.addr %s155, 8
        %s157 = scalar_lea.vmem %s2, %s156
      $region20: #{bn_quant_forward.1} parent=11 // pred_fallthru
        _
    $region12: #{bn_quant_forward.1} parent=5 // pred_fallthru
      _
    %p158 = scmp.lt.s32.totalorder %s9, 2
    // Predicated region
    $region21: #{bn_quant_forward.1} parent=5 // pred_check
      %p159 = pneg %p158
    $region22: #{bn_quant_forward.1} parent=5 // pred_check_branch
      %161 = sbr.rel (%p159) target = $region24
    $region23: #{bn_quant_forward.1} parent=5 // pred_region
      // Predicated region
      $region25: #{bn_quant_forward.1} parent=23 // pred_check
        %p162 = pneg %p43
      $region26: #{bn_quant_forward.1} parent=23 // pred_check_branch
        %164 = sbr.rel (%p162) target = $region28
      $region27: #{bn_quant_forward.1} parent=23 // pred_region
        %p165 = scmp.lt.s32.totalorder %s16, 0
        %s166 = scalar_select %p165, %s16, 0
        %p167 = scmp.lt.s32.totalorder %s17, 1
        %s168 = scalar_select %p167, %s17, 1
        %s169 = smul.addr %s166, 2
        %s170 = sadd.s32 %s168, %s169
        %s171 = smul.addr %s170, 8
        %s172 = scalar_lea.vmem %s0, %s171
      $region28: #{bn_quant_forward.1} parent=23 // pred_fallthru
        _
    $region24: #{bn_quant_forward.1} parent=5 // pred_fallthru
      _
    %p173 = scmp.le.s32.totalorder 1, %s9
    %p174 = scmp.lt.s32.totalorder %s9, 3
    %p175 = pnand %p173, %p174
    %p176 = pneg %p175
    // Predicated region
    $region29: #{bn_quant_forward.1} parent=5 // pred_check
      _
    $region30: #{bn_quant_forward.1} parent=5 // pred_check_branch
      %178 = sbr.rel (%p175) target = $region32
    $region31: #{bn_quant_forward.1} parent=5 // pred_region
      %s179 = ssub.s32 %s9, 1
      %p180 = scmp.lt.s32.totalorder %s18, 0
      %s181 = scalar_select %p180, %s18, 0
      %p182 = scmp.lt.s32.totalorder %s19, 1
      %s183 = scalar_select %p182, %s19, 1
      %s184 = smul.addr %s181, 2
      %s185 = sadd.s32 %s183, %s184
      %s186 = smul.addr %s185, 8
      %s187 = scalar_lea.vmem %s0, %s186
      %p188 = pneg %p49
      %p189 = pneg %p46
      %p190 = scmp.lt.s32.totalorder %s18, 0
      %s191 = scalar_select %p190, %s18, 0
      %s192 = smul.addr %s191, 8
      %s193 = scalar_lea.vmem %s1, %s192
      %p194 = pneg %p75
      %p195 = pneg %p72
      %p196 = scmp.lt.s32.totalorder %s18, 0
      %s197 = scalar_select %p196, %s18, 0
      %s198 = smul.addr %s197, 8
      %s199 = scalar_lea.vmem %s2, %s198
      %p200 = pneg %p101
      %p201 = pneg %p98
      %p202 = pneg %p129
      %p203 = pneg %p126
      %p204 = scmp.lt.s32.totalorder %s18, 0
      %s205 = scalar_select %p204, %s18, 0
      %p206 = scmp.lt.s32.totalorder %s19, 1
      %s207 = scalar_select %p206, %s19, 1
      %s208 = smul.addr %s205, 2
      %s209 = sadd.s32 %s207, %s208
      %s210 = smul.addr %s209, 8
      %s211 = scalar_lea.vmem %s3, %s210
      %p212 = scmp.lt.s32.totalorder %s18, 0
      %s213 = scalar_select %p212, %s18, 0
      %p214 = scmp.lt.s32.totalorder %s19, 1
      %s215 = scalar_select %p214, %s19, 1
      %s216 = smul.addr %s213, 2
      %s217 = sadd.s32 %s215, %s216
      %s218 = smul.addr %s217, 8
      %s219 = scalar_lea.vmem %s0, %s218
      %p220 = scmp.lt.s32.totalorder %s18, 0
      %s221 = scalar_select %p220, %s18, 0
      %s222 = smul.addr %s221, 8
      %s223 = scalar_lea.vmem %s1, %s222
      %p224 = scmp.lt.s32.totalorder %s18, 0
      %s225 = scalar_select %p224, %s18, 0
      %s226 = smul.addr %s225, 8
      %s227 = scalar_lea.vmem %s2, %s226
      %p228 = scmp.lt.s32.totalorder %s18, 0
      %s229 = scalar_select %p228, %s18, 0
      %p230 = scmp.lt.s32.totalorder %s19, 1
      %s231 = scalar_select %p230, %s19, 1
      %s232 = smul.addr %s229, 2
      %s233 = sadd.s32 %s231, %s232
      %s234 = smul.addr %s233, 8
      %s235 = scalar_lea.vmem %s3, %s234
      %v236 = vld [vmem:[%s219] sm:$0xff]
      %v237 = vmul.f32 %v236, 16.0
      %v238 = vround.ne.pseudo %v237
      %v239 = vmax.f32 %v238, -128.0
      %v240 = vmin.f32 %v239, 127.0
      %v241 = vld [vmem:[%s223] sm:$0xff]
      %243 = vset.pattern.permute.xlu0 0
      %244 = vperm.xlu0 %243, %v241
      %v245 = vpop.permute.xlu0 %244
      %v247 = vmul.f32 %v240, %v245
      %v248 = vld [vmem:[%s227] sm:$0xff]
      %250 = vset.pattern.permute.xlu0 0
      %251 = vperm.xlu0 %250, %v248
      %v252 = vpop.permute.xlu0 %251
      %v254 = vadd.f32 %v247, %v252
      %255 = vst [vmem:[%s235] sm:$0xff] %v254
      %p256 = scmp.lt.s32.totalorder %s18, 0
      %s257 = scalar_select %p256, %s18, 0
      %p258 = scmp.lt.s32.totalorder %s19, 1
      %s259 = scalar_select %p258, %s19, 1
      %s260 = smul.addr %s257, 2
      %s261 = sadd.s32 %s259, %s260
      %s262 = smul.addr %s261, 8
      %s263 = scalar_lea.vmem %s3, %s262
      // Predicated region
      $region33: #{bn_quant_forward.1} parent=31 // pred_check
        %p264 = pneg %p126
      $region34: #{bn_quant_forward.1} parent=31 // pred_check_branch
        %266 = sbr.rel (%p264) target = $region36
      $region35: #{bn_quant_forward.1} parent=31 // pred_region
        _
      $region36: #{bn_quant_forward.1} parent=31 // pred_fallthru
        _
    $region32: #{bn_quant_forward.1} parent=5 // pred_fallthru
      _
    %p267 = scmp.le.s32.totalorder 2, %s9
    // Predicated region
    $region37: #{bn_quant_forward.1} parent=5 // pred_check
      %p268 = pneg %p267
    $region38: #{bn_quant_forward.1} parent=5 // pred_check_branch
      %270 = sbr.rel (%p268) target = $region40
    $region39: #{bn_quant_forward.1} parent=5 // pred_region
      %s271 = ssub.s32 %s9, 2
      // Predicated region
      $region41: #{bn_quant_forward.1} parent=39 // pred_check
        %p272 = pneg %p132
      $region42: #{bn_quant_forward.1} parent=39 // pred_check_branch
        %274 = sbr.rel (%p272) target = $region44
      $region43: #{bn_quant_forward.1} parent=39 // pred_region
        %p275 = scmp.lt.s32.totalorder %s20, 0
        %s276 = scalar_select %p275, %s20, 0
        %p277 = scmp.lt.s32.totalorder %s21, 1
        %s278 = scalar_select %p277, %s21, 1
        %s279 = smul.addr %s276, 2
        %s280 = sadd.s32 %s278, %s279
        %s281 = smul.addr %s280, 8
        %s282 = scalar_lea.vmem %s3, %s281
      $region44: #{bn_quant_forward.1} parent=39 // pred_fallthru
        _
    $region40: #{bn_quant_forward.1} parent=5 // pred_fallthru
      _
  $region6: #{bn_quant_forward.1} parent=0 // loop_footer
    %s13 = sadd.s32 1, %s9
  $region7: #{bn_quant_forward.1} parent=0 // loop_footer_branch
    %8 = sbr.rel target = $region3
  $region8: #{bn_quant_forward.1} parent=0 // loop_exit
    _

</llo_original>
